<compile_context>
chip_gen: v5e
topology: v5e:2x2
jax: 0.10.0
libtpu: 0.0.40
codegen_flags: <defaults>
</compile_context>

<pallas_src>
import functools

import jax
import jax.numpy as jnp
from jax.experimental import pallas as pl
from jax.experimental.pallas import tpu as pltpu

_LANES = 128
_ROW_QUANTUM = 512                      # multiple of every sublane quantum (8/16/32) 
_VMEM_STEP_BYTES = 12 * 1024 * 1024     # in-block + out-block VMEM per pipeline step
_VMEM_LIMIT_BYTES = 30 * 1024 * 1024    # 2x double-buffered steps + headroom (ok on v5e..v7x)


def _round_up(x, m):
    return ((x + m - 1) // m) * m


def _sublane_quantum(dtype):
    return {4: 8, 2: 16, 1: 32}.get(jnp.dtype(dtype).itemsize, 8)


def _pick_tile_rows(total_rows, vmem_bytes_per_row, sublane_quantum):
    """Rows per grid step: VMEM-budgeted, tiling-rule quantized, v7x TC-balanced."""
    budget_rows = max(1, _VMEM_STEP_BYTES // max(1, vmem_bytes_per_row))
    quantum = _ROW_QUANTUM if budget_rows >= _ROW_QUANTUM else sublane_quantum
    tile = max(quantum, (budget_rows // quantum) * quantum)
    if total_rows <= tile:
        return total_rows, 1            # one full-dim block: always a legal BlockSpec
    steps = pl.cdiv(total_rows, tile)
    if steps % 2 == 1:                  # balance v7x's 2 TensorCores; harmless on 1-TC chips
        tile = _round_up(pl.cdiv(total_rows, steps + 1), quantum)
        steps = pl.cdiv(total_rows, tile)
    return tile, steps


def _lane_dense_kernel(h_ref, s_ref, *, embed, k):
    # h_ref: (T, 128) lane-dense rows, each holding k segments of `embed` values.
    # s_ref: (T, k)   per-segment maxes, ReLU'd.  Row i of s_ref <- row i of h_ref.
    x = h_ref[...]
    segs = [jnp.max(x[:, j * embed:(j + 1) * embed], axis=-1, keepdims=True)
            for j in range(k)]
    m = segs[0] if k == 1 else jnp.concatenate(segs, axis=-1)
    s_ref[...] = jnp.maximum(m, 0).astype(s_ref.dtype)


def _rowwise_kernel(h_ref, s_ref):
    # Fallback path (E does not divide 128).  h_ref: (T, E); s_ref: (T, 1).
    m = jnp.max(h_ref[...], axis=-1, keepdims=True)
    s_ref[...] = jnp.maximum(m, 0).astype(s_ref.dtype)


def avg_read(h):
    """h: (B, N, F, E) -> relu(max(h, axis=3)), shape (B, N, F)."""
    B, N, F, E = h.shape
    M = B * N * F
    itemsize = jnp.dtype(h.dtype).itemsize
    squant = _sublane_quantum(h.dtype)

    cost = pl.CostEstimate(
        flops=M * E + M,
        transcendentals=0,
        bytes_accessed=M * E * itemsize + M * itemsize,
    )
    cparams = pltpu.CompilerParams(
        dimension_semantics=("parallel",),
        vmem_limit_bytes=_VMEM_LIMIT_BYTES,
    )

    lane_dense = (8 <= E <= _LANES and _LANES % E == 0 and M % (_LANES // E) == 0)

    if lane_dense:
        k = _LANES // E
        rows = M // k                                  # = M * E / 128
        h3 = h.reshape(rows, _LANES)                   # contiguous merge of dims (no copy)
        # VMEM per row: dense 128-lane input row + output row (k lanes, padded to 128).
        vmem_per_row = 2 * _LANES * itemsize
        tile, steps = _pick_tile_rows(rows, vmem_per_row, squant)
        out = pl.pallas_call(
            functools.partial(_lane_dense_kernel, embed=E, k=k),
            out_shape=jax.ShapeDtypeStruct((rows, k), h.dtype),
            grid=(steps,),
            in_specs=[pl.BlockSpec((tile, _LANES), lambda i: (i, 0))],
            out_specs=pl.BlockSpec((tile, k), lambda i: (i, 0)),
            compiler_params=cparams,
            cost_estimate=cost,
        )(h3)
        # (rows, k) row-major is exactly the flat (B*N*F,) output order.
        return out.reshape(B, N, F)

    # Fallback: E stays on the lane axis (pads to a multiple of 128 lanes in VMEM).
    h2 = h.reshape(M, E)                               # contiguous merge of dims (no copy)
    e_vmem = _round_up(E, _LANES)
    vmem_per_row = (e_vmem + _LANES) * itemsize        # input row + lane-padded output row
    tile, steps = _pick_tile_rows(M, vmem_per_row, squant)
    out = pl.pallas_call(
        _rowwise_kernel,
        out_shape=jax.ShapeDtypeStruct((M, 1), h.dtype),
        grid=(steps,),
        in_specs=[pl.BlockSpec((tile, E), lambda i: (i, 0))],
        out_specs=pl.BlockSpec((tile, 1), lambda i: (i, 0)),
        compiler_params=cparams,
        cost_estimate=cost,
    )(h2)
    return out.reshape(B, N, F)


if __name__ == "__main__":
    key = jax.random.PRNGKey(0)

    # Primary case (lane-dense path): E=32 -> k=4 segments per 128-lane row.
    B, N, F, E = 2, 4, 16, 32
    h = jax.random.normal(key, (B, N, F, E), dtype=jnp.float32)
    s = jax.block_until_ready(avg_read(h))
    ref = jnp.maximum(jnp.max(h, axis=3), 0.0)
    assert s.shape == (B, N, F)
    assert jnp.allclose(s, ref, atol=1e-6), "mismatch vs reference (lane-dense path)"

    # Fallback path sanity check: E does not divide 128.
    h2 = jax.random.normal(jax.random.PRNGKey(1), (2, 3, 5, 20), dtype=jnp.float32)
    s2 = jax.block_until_ready(avg_read(h2))
    ref2 = jnp.maximum(jnp.max(h2, axis=3), 0.0)
    assert jnp.allclose(s2, ref2, atol=1e-6), "mismatch vs reference (fallback path)"

    print("KERNEL_OK")
</pallas_src>

<mosaic_0001>
module attributes {stable_mosaic.version = 11 : i64} {
  func.func @_lane_dense_kernel(%arg0: i32, %arg1: memref<32x128xf32, #tpu.memory_space<vmem>>, %arg2: memref<32x4xf32, #tpu.memory_space<vmem>>) attributes {dimension_semantics = [#tpu.dimension_semantics<parallel>], iteration_bounds = array<i64: 1>, scalar_prefetch = 0 : i64, scratch_operands = 0 : i64, tpu.core_type = #tpu.core_type<tc>, window_params = [{transform_indices = @transform_0, window_bounds = array<i64: 32, 128>}, {transform_indices = @transform_1, window_bounds = array<i64: 32, 4>}]} {
    %c0 = arith.constant 0 : index
    %c0_0 = arith.constant 0 : index
    %0 = vector.load %arg1[%c0, %c0_0] : memref<32x128xf32, #tpu.memory_space<vmem>>, vector<32x128xf32>
    %1 = vector.extract_strided_slice %0 {offsets = [0, 0], sizes = [32, 32], strides = [1, 1]} : vector<32x128xf32> to vector<32x32xf32>
    %cst = arith.constant dense<0xFF800000> : vector<32xf32>
    %2 = vector.multi_reduction <maximumf>, %1, %cst [1] : vector<32x32xf32> to vector<32xf32>
    %3 = vector.shape_cast %2 : vector<32xf32> to vector<32x1xf32>
    %4 = vector.extract_strided_slice %0 {offsets = [0, 32], sizes = [32, 32], strides = [1, 1]} : vector<32x128xf32> to vector<32x32xf32>
    %cst_1 = arith.constant dense<0xFF800000> : vector<32xf32>
    %5 = vector.multi_reduction <maximumf>, %4, %cst_1 [1] : vector<32x32xf32> to vector<32xf32>
    %6 = vector.shape_cast %5 : vector<32xf32> to vector<32x1xf32>
    %7 = vector.extract_strided_slice %0 {offsets = [0, 64], sizes = [32, 32], strides = [1, 1]} : vector<32x128xf32> to vector<32x32xf32>
    %cst_2 = arith.constant dense<0xFF800000> : vector<32xf32>
    %8 = vector.multi_reduction <maximumf>, %7, %cst_2 [1] : vector<32x32xf32> to vector<32xf32>
    %9 = vector.shape_cast %8 : vector<32xf32> to vector<32x1xf32>
    %10 = vector.extract_strided_slice %0 {offsets = [0, 96], sizes = [32, 32], strides = [1, 1]} : vector<32x128xf32> to vector<32x32xf32>
    %cst_3 = arith.constant dense<0xFF800000> : vector<32xf32>
    %11 = vector.multi_reduction <maximumf>, %10, %cst_3 [1] : vector<32x32xf32> to vector<32xf32>
    %12 = vector.shape_cast %11 : vector<32xf32> to vector<32x1xf32>
    %13 = tpu.concatenate %3, %6, %9, %12 in 1 : vector<32x1xf32>, vector<32x1xf32>, vector<32x1xf32>, vector<32x1xf32> -> vector<32x4xf32>
    %cst_4 = arith.constant 0.000000e+00 : f32
    %14 = vector.broadcast %cst_4 : f32 to vector<32x4xf32>
    %15 = arith.maximumf %13, %14 : vector<32x4xf32>
    %c0_5 = arith.constant 0 : index
    %c0_6 = arith.constant 0 : index
    %16 = vector.load %arg2[%c0_5, %c0_6] : memref<32x4xf32, #tpu.memory_space<vmem>>, vector<32x4xf32>
    tpu.vector_store %arg2[%c0_5, %c0_6], %15 {strides = array<i32>} : memref<32x4xf32, #tpu.memory_space<vmem>>, vector<32x4xf32>,
    return
  }
  func.func @transform_0(%arg0: i32) -> (i32, i32) {
    %c0_i32 = arith.constant 0 : i32
    %c0_i32_0 = arith.constant 0 : i32
    return %arg0, %c0_i32 : i32, i32
  }
  func.func @transform_1(%arg0: i32) -> (i32, i32) {
    %c0_i32 = arith.constant 0 : i32
    %c0_i32_0 = arith.constant 0 : i32
    return %arg0, %c0_i32 : i32, i32
  }
}

</mosaic_0001>

<llo_original>
// kernel: tpu_custom_call.1
$region0: #{tpu_custom_call.1}
  #allocation0 [shape = 'u32[]', space=smem, size = 0x4, offset = 0x4, fixed_abs, tag = 'smem constant byte address 0x4 - core index']
  #allocation1 [shape = 'u32[72,128]{1,0:T(1,128)}', space=vmem, size = 0x9000, scoped, tag = 'internal scratch']
  %s0 = inlined_call_operand.hbm [shape: f32[32,128], index: 0, kind: input, shape index: {}]
  %s1 = inlined_call_operand.vmem [shape: f32[32,4], index: 1, kind: output, shape index: {}]
  %s2 = sld [smem:[#allocation0]]
  $region18: #{tpu_custom_call.1} parent=0
    _
  %s4 = ssub.s32 1, %s2
  %s5 = scalar_select 0, %s4, %s2
  $region1: #{tpu_custom_call.1} parent=0
    #allocation2 [shape = 'u8[16384]{0}', space=vmem, size = 0x4000, scoped, tag = 'input window, operand 0, single buffered']
    #allocation3 [shape = 's32[1]{0}', space=sflag, size = 0x4, scoped, tag = 'scoped memory for tpu_custom_call.1']
    %6 = vsyncpa [#allocation3], 0
    // Predicated region
    $region2: #{tpu_custom_call.1} parent=1 // pred_check
      _
    $region3: #{tpu_custom_call.1} parent=1 // pred_check_branch
      %8 = sbr.rel (0) target = $region5
    $region4: #{tpu_custom_call.1} parent=1 // pred_region
      %10 = vsyncadd [#allocation3], 0
      %s11 = sshll.u32 %s0, 4
      %s12 = int_to_ptr.hbm [resolvable:$true] %s11
      %s13 = sshll.u32 [#allocation2], 4
      %s14 = int_to_ptr.vmem [resolvable:$true] %s13
      %19 = dma.hbm_to_vmem [thread:$0]  %s12, 512, %s14, [#allocation3], 128, 128, 8
    $region5: #{tpu_custom_call.1} parent=1 // pred_fallthru
      _
    // Predicated region
    $region6: #{tpu_custom_call.1} parent=1 // pred_check
      _
    $region7: #{tpu_custom_call.1} parent=1 // pred_check_branch
      %21 = sbr.rel (0) target = $region9
    $region8: #{tpu_custom_call.1} parent=1 // pred_region
      %23 = dma.done [#allocation3], 512
    $region9: #{tpu_custom_call.1} parent=1 // pred_fallthru
      _
    %v24 = vld [vmem:[#allocation2] sm:$0xff]
    %v25 = vld [vmem:[#allocation2 + $0x8] sm:$0xff]
    %v26 = vld [vmem:[#allocation2 + $0x10] sm:$0xff]
    %v27 = vld [vmem:[#allocation2 + $0x18] sm:$0xff]
    %vm28 = vcmask 261120
    %v29 = vsel %vm28, %v24, -inf
    %30 = vmax.xlane.f32.xlu0 %v29
    %v31 = vpop.xlane.xlu0 %30
    %v32 = vsel %vm28, %v25, -inf
    %33 = vmax.xlane.f32.xlu0 %v32
    %v34 = vpop.xlane.xlu0 %33
    %v35 = vsel %vm28, %v26, -inf
    %36 = vmax.xlane.f32.xlu0 %v35
    %v37 = vpop.xlane.xlu0 %36
    %v38 = vsel %vm28, %v27, -inf
    %39 = vmax.xlane.f32.xlu0 %v38
    %v40 = vpop.xlane.xlu0 %39
    %vm41 = vcmask 523520
    %v42 = vsel %vm41, %v24, -inf
    %43 = vmax.xlane.f32.xlu0 %v42
    %v44 = vpop.xlane.xlu0 %43
    %v45 = vsel %vm41, %v25, -inf
    %46 = vmax.xlane.f32.xlu0 %v45
    %v47 = vpop.xlane.xlu0 %46
    %v48 = vsel %vm41, %v26, -inf
    %49 = vmax.xlane.f32.xlu0 %v48
    %v50 = vpop.xlane.xlu0 %49
    %v51 = vsel %vm41, %v27, -inf
    %52 = vmax.xlane.f32.xlu0 %v51
    %v53 = vpop.xlane.xlu0 %52
    %vm54 = vcmask 785920
    %v55 = vsel %vm54, %v24, -inf
    %56 = vmax.xlane.f32.xlu0 %v55
    %v57 = vpop.xlane.xlu0 %56
    %v58 = vsel %vm54, %v25, -inf
    %59 = vmax.xlane.f32.xlu0 %v58
    %v60 = vpop.xlane.xlu0 %59
    %v61 = vsel %vm54, %v26, -inf
    %62 = vmax.xlane.f32.xlu0 %v61
    %v63 = vpop.xlane.xlu0 %62
    %v64 = vsel %vm54, %v27, -inf
    %65 = vmax.xlane.f32.xlu0 %v64
    %v66 = vpop.xlane.xlu0 %65
    %vm67 = vcmask 1048320
    %v68 = vsel %vm67, %v24, -inf
    %69 = vmax.xlane.f32.xlu0 %v68
    %v70 = vpop.xlane.xlu0 %69
    %v71 = vsel %vm67, %v25, -inf
    %72 = vmax.xlane.f32.xlu0 %v71
    %v73 = vpop.xlane.xlu0 %72
    %v74 = vsel %vm67, %v26, -inf
    %75 = vmax.xlane.f32.xlu0 %v74
    %v76 = vpop.xlane.xlu0 %75
    %v77 = vsel %vm67, %v27, -inf
    %78 = vmax.xlane.f32.xlu0 %v77
    %v79 = vpop.xlane.xlu0 %78
    %vm80 = vcmask 7168
    %v81 = vsel %vm80, %v31, %v44
    %v82 = vsel %vm80, %v34, %v47
    %v83 = vsel %vm80, %v37, %v50
    %v84 = vsel %vm80, %v40, %v53
    %vm85 = vcmask 15360
    %v86 = vsel %vm85, %v81, %v57
    %v87 = vsel %vm85, %v82, %v60
    %v88 = vsel %vm85, %v83, %v63
    %v89 = vsel %vm85, %v84, %v66
    %vm90 = vcmask 23552
    %v91 = vsel %vm90, %v86, %v70
    %v92 = vsel %vm90, %v87, %v73
    %v93 = vsel %vm90, %v88, %v76
    %v94 = vsel %vm90, %v89, %v79
    %v95 = vmax.f32 %v91, 0.0
    %v96 = vmax.f32 %v92, 0.0
    %v97 = vmax.f32 %v93, 0.0
    %v98 = vmax.f32 %v94, 0.0
    %vm99 = vcmask 31744
    %100 = vst.msk [vmem:[%s1] sm:$0xff] %vm99, %v95
    %101 = vst.msk [vmem:[%s1 + $0x8] sm:$0xff] %vm99, %v96
    %102 = vst.msk [vmem:[%s1 + $0x10] sm:$0xff] %vm99, %v97
    %103 = vst.msk [vmem:[%s1 + $0x18] sm:$0xff] %vm99, %v98
    // Predicated region
    $region10: #{tpu_custom_call.1} parent=1 // pred_check
      _
    $region11: #{tpu_custom_call.1} parent=1 // pred_check_branch
      %105 = sbr.rel (0) target = $region13
    $region12: #{tpu_custom_call.1} parent=1 // pred_region
      _
    $region13: #{tpu_custom_call.1} parent=1 // pred_fallthru
      _
    // Predicated region
    $region14: #{tpu_custom_call.1} parent=1 // pred_check
      _
    $region15: #{tpu_custom_call.1} parent=1 // pred_check_branch
      %107 = sbr.rel (0) target = $region17
    $region16: #{tpu_custom_call.1} parent=1 // pred_region
      _
    $region17: #{tpu_custom_call.1} parent=1 // pred_fallthru
      _
    %108 = vsyncpa [#allocation3], 1

</llo_original>
